<compile_context>
chip_gen: v6e
topology: v6e:2x2x1
jax: 0.10.0
libtpu: 0.0.40
codegen_flags: <defaults>
</compile_context>

<pallas_src>
import numpy as np
import jax
import jax.numpy as jnp
from jax import lax
from jax.experimental import pallas as pl
from jax.experimental.pallas import tpu as pltpu


# ----------------------------------------------------------------------------
# helpers
# ----------------------------------------------------------------------------
def _round_up(x: int, m: int) -> int:
    return ((x + m - 1) // m) * m


def _pad2(a, rows: int, cols: int):
    r, c = a.shape
    return jnp.pad(a, ((0, rows - r), (0, cols - c)))


def _make_activation(p: float):
    """|a|^p * sign(a), special-cased so common cases never touch jnp.power."""
    p = float(p)
    if p == 1.0:
        return lambda a: a                       # identity
    if p == 2.0:
        return lambda a: a * jnp.abs(a)
    if p.is_integer() and p > 1.0:
        n = int(p)

        def act(a):
            aa = jnp.abs(a)
            r = a
            for _ in range(n - 1):
                r = r * aa
            return r

        return act
    if p > 1.0:
        # a * |a|^(p-1): drops the sign()+multiply, safe at a == 0 since p-1 > 0
        return lambda a: a * jnp.power(jnp.abs(a), jnp.float32(p - 1.0))
    # 0 < p < 1 (non-integer): keep torch's exact form (safe at a == 0)
    return lambda a: jnp.power(jnp.abs(a), jnp.float32(p)) * jnp.sign(a)


# ----------------------------------------------------------------------------
# kernel 1: generic linear  o = x @ w + b   (w pre-transposed wrapper-side)
# ----------------------------------------------------------------------------
def _linear_kernel(x_ref, w_ref, b_ref, o_ref):
    o_ref[...] = (
        jnp.dot(x_ref[...], w_ref[...], preferred_element_type=jnp.float32)
        + b_ref[...]
    ).astype(o_ref.dtype)


def pallas_linear(x, w_t, b, *, tn_pref: int = 512):
    """x: [N, K], w_t: [K, O], b: [O] -> [N, O]."""
    N, K = x.shape
    K2, O = w_t.shape
    assert K == K2
    Kp = _round_up(K, 128)
    Op = _round_up(O, 128)
    tn = min(tn_pref, _round_up(N, 8))
    Np = _round_up(N, tn)

    xp = _pad2(x.astype(jnp.float32), Np, Kp)
    wp = _pad2(w_t.astype(jnp.float32), Kp, Op)
    bp = _pad2(b.astype(jnp.float32).reshape(1, -1), 1, Op)

    out = pl.pallas_call(
        _linear_kernel,
        out_shape=jax.ShapeDtypeStruct((Np, Op), jnp.float32),
        grid_spec=pltpu.PrefetchScalarGridSpec(
            num_scalar_prefetch=0,
            grid=(Np // tn,),
            in_specs=[
                pl.BlockSpec((tn, Kp), lambda i: (i, 0)),
                pl.BlockSpec((Kp, Op), lambda i: (0, 0)),
                pl.BlockSpec((1, Op), lambda i: (0, 0)),
            ],
            out_specs=pl.BlockSpec((tn, Op), lambda i: (i, 0)),
        ),
        compiler_params=pltpu.CompilerParams(dimension_semantics=("parallel",)),
    )(xp, wp, bp)
    return out[:N, :O]


# ----------------------------------------------------------------------------
# kernel 2 (p == 1, no softmax): w = Dw^T @ rw, tiled reduction over M
# ----------------------------------------------------------------------------
def _dt_r_kernel(dw_ref, r_ref, p_ref, acc_ref):
    m = pl.program_id(0)

    @pl.when(m == 0)
    def _():
        acc_ref[...] = jnp.zeros_like(acc_ref)

    # contract first (row / M) axis of both operands -> MXU transposed-LHS path
    acc_ref[...] += lax.dot_general(
        dw_ref[...], r_ref[...],
        dimension_numbers=(((0,), (0,)), ((), ())),
        preferred_element_type=jnp.float32)

    @pl.when(m == pl.num_programs(0) - 1)
    def _():
        p_ref[...] = acc_ref[...].astype(p_ref.dtype)


def minerva_dt_r(Dw, rw, *, tm_pref: int = 512, compute_dtype=jnp.float32):
    """Dw: [M, d], rw: [M, k] -> Dw^T @ rw: [d, k]."""
    M, d = Dw.shape
    M2, k = rw.shape
    assert M == M2
    dp = _round_up(d, 128)
    kp = _round_up(k, 128)
    tm = min(tm_pref, _round_up(M, 8))
    Mp = _round_up(M, tm)

    Dp = _pad2(Dw, Mp, dp).astype(compute_dtype)
    Rp = _pad2(rw, Mp, kp).astype(compute_dtype)

    out = pl.pallas_call(
        _dt_r_kernel,
        out_shape=jax.ShapeDtypeStruct((dp, kp), jnp.float32),
        grid_spec=pltpu.PrefetchScalarGridSpec(
            num_scalar_prefetch=0,
            grid=(Mp // tm,),
            in_specs=[
                pl.BlockSpec((tm, dp), lambda m: (m, 0)),
                pl.BlockSpec((tm, kp), lambda m: (m, 0)),
            ],
            out_specs=pl.BlockSpec((dp, kp), lambda m: (0, 0)),
            scratch_shapes=[pltpu.VMEM((dp, kp), jnp.float32)],
        ),
        compiler_params=pltpu.CompilerParams(dimension_semantics=("arbitrary",)),
    )(Dp, Rp)
    return out[:d, :k]


# ----------------------------------------------------------------------------
# kernel 3 (general p path, optional softmax):
#   out = [softmax_M](act(Xw @ Dw^T)) @ rw + be
# grid: (N tiles parallel, M tiles arbitrary/last) with f32 accumulators
# ----------------------------------------------------------------------------
def _make_pool_kernel(p_factor: float, use_sm: bool, m_actual: int, tm: int):
    act = _make_activation(p_factor)

    if not use_sm:
        def kernel(xw_ref, dw_ref, rw_ref, be_ref, o_ref, acc_ref):
            m = pl.program_id(1)

            @pl.when(m == 0)
            def _():
                acc_ref[...] = jnp.zeros_like(acc_ref)

            # similarity tile [tn, tm]: contract last dims (no .T materialization)
            a = lax.dot_general(
                xw_ref[...], dw_ref[...],
                dimension_numbers=(((1,), (1,)), ((), ())),
                preferred_element_type=jnp.float32)
            a = act(a)
            acc_ref[...] += jnp.dot(
                a.astype(rw_ref.dtype), rw_ref[...],
                preferred_element_type=jnp.float32)

            @pl.when(m == pl.num_programs(1) - 1)
            def _():
                o_ref[...] = (acc_ref[...] + be_ref[...]).astype(o_ref.dtype)

        return kernel

    def kernel(xw_ref, dw_ref, rw_ref, be_ref, o_ref, acc_ref, m_sc, l_sc):
        m = pl.program_id(1)

        @pl.when(m == 0)
        def _():
            acc_ref[...] = jnp.zeros_like(acc_ref)
            m_sc[...] = jnp.full_like(m_sc, -jnp.inf)
            l_sc[...] = jnp.zeros_like(l_sc)

        a = lax.dot_general(
            xw_ref[...], dw_ref[...],
            dimension_numbers=(((1,), (1,)), ((), ())),
            preferred_element_type=jnp.float32)
        s = act(a)                                                   # [tn, tm]
        # mask padded memory columns so they don't enter the softmax denominator
        col = m * tm + lax.broadcasted_iota(jnp.int32, s.shape, 1)
        s = jnp.where(col < m_actual, s, -jnp.inf)

        m_new = jnp.maximum(m_sc[...], s.max(axis=-1, keepdims=True))   # [tn, 1]
        alpha = jnp.exp(m_sc[...] - m_new)
        p = jnp.exp(s - m_new)
        l_sc[...] = alpha * l_sc[...] + p.sum(axis=-1, keepdims=True)
        acc_ref[...] = alpha * acc_ref[...] + jnp.dot(
            p.astype(rw_ref.dtype), rw_ref[...],
            preferred_element_type=jnp.float32)
        m_sc[...] = m_new

        @pl.when(m == pl.num_programs(1) - 1)
        def _():
            o_ref[...] = (acc_ref[...] / l_sc[...] + be_ref[...]).astype(o_ref.dtype)

    return kernel


def minerva_pool(Xw, Dw, rw, be, p_factor, use_sm, *, tn_pref: int = 512,
                 tm_pref: int = 512, compute_dtype=jnp.float32):
    """Xw: [N, d], Dw: [M, d], rw: [M, 1], be: [1] -> [N, 1]."""
    N, d = Xw.shape
    M, d2 = Dw.shape
    M2, k = rw.shape
    assert d == d2 and M == M2
    dp = _round_up(d, 128)
    kp = _round_up(k, 128)
    tn = min(tn_pref, _round_up(N, 8))
    tm = min(tm_pref, _round_up(M, 8))
    Np = _round_up(N, tn)
    Mp = _round_up(M, tm)

    Xp = _pad2(Xw, Np, dp).astype(compute_dtype)
    Dp = _pad2(Dw, Mp, dp).astype(compute_dtype)
    Rp = _pad2(rw, Mp, kp).astype(compute_dtype)
    bp = _pad2(be.astype(jnp.float32).reshape(1, -1), 1, kp)

    scratch = [pltpu.VMEM((tn, kp), jnp.float32)]
    if use_sm:
        scratch += [pltpu.VMEM((tn, 1), jnp.float32),
                    pltpu.VMEM((tn, 1), jnp.float32)]

    out = pl.pallas_call(
        _make_pool_kernel(float(p_factor), bool(use_sm), M, tm),
        out_shape=jax.ShapeDtypeStruct((Np, kp), jnp.float32),
        grid_spec=pltpu.PrefetchScalarGridSpec(
            num_scalar_prefetch=0,
            grid=(Np // tn, Mp // tm),
            in_specs=[
                pl.BlockSpec((tn, dp), lambda i, m: (i, 0)),
                pl.BlockSpec((tm, dp), lambda i, m: (m, 0)),
                pl.BlockSpec((tm, kp), lambda i, m: (m, 0)),
                pl.BlockSpec((1, kp), lambda i, m: (0, 0)),
            ],
            out_specs=pl.BlockSpec((tn, kp), lambda i, m: (i, 0)),
            scratch_shapes=scratch,
        ),
        compiler_params=pltpu.CompilerParams(
            dimension_semantics=("parallel", "arbitrary")),
    )(Xp, Dp, Rp, bp)
    return out[:N, :k]


# ----------------------------------------------------------------------------
# module setup (constants / parameters)
# ----------------------------------------------------------------------------
def _make_encoding_ids():
    vals = []
    for i in range(1, 21):
        for j in range(i + 1):
            vals.append(j / i)
    enc = np.unique(np.asarray(vals, dtype=np.float32))   # unique also sorts
    return jnp.asarray(enc)


def _get_position_encoding(seq_len, d, n=10000):
    P = np.zeros((seq_len, d), dtype=np.float32)
    k = np.arange(seq_len, dtype=np.float32)
    for i in range(d // 2):
        denom = float(n) ** (2.0 * i / d)
        P[:, 2 * i] = np.sin(k / denom)
        P[:, 2 * i + 1] = np.cos(k / denom)
    return jnp.asarray(P)


def init_params(key, input_dim, rep_dim, R_dim):
    def linear_init(k, out_f, in_f):
        kw, kb = jax.random.split(k)
        bound = 1.0 / np.sqrt(in_f)
        w = jax.random.uniform(kw, (out_f, in_f), jnp.float32, -bound, bound)
        b = jax.random.uniform(kb, (out_f,), jnp.float32, -bound, bound)
        return w, b

    k1, k2, k3 = jax.random.split(key, 3)
    Wx_w, Wx_b = linear_init(k1, rep_dim, input_dim)
    Wd_w, Wd_b = linear_init(k2, rep_dim, input_dim)
    We_w, We_b = linear_init(k3, 1, R_dim)
    enc = _make_encoding_ids()
    pos = _get_position_encoding(enc.shape[0], R_dim)
    return dict(Wx_w=Wx_w, Wx_b=Wx_b, Wd_w=Wd_w, Wd_b=Wd_b,
                We_w=We_w, We_b=We_b, encoding_ids=enc, pos_encoding=pos)


# ----------------------------------------------------------------------------
# full forward
# ----------------------------------------------------------------------------
def minerva_with_encoding_forward(params, X, D, R, p_factor=1.0, use_sm=False,
                                  compute_dtype=jnp.float32):
    # Nearest-encoding lookup is tiny and gather-heavy -> plain JAX.
    enc = params["encoding_ids"]                          # [E]
    pos = params["pos_encoding"]                          # [E, R_dim]
    pos_ids = jnp.argmin(jnp.abs(R - enc[None, :]), axis=1)

    # Fuse the final We linear into the pooling math:
    #   (a @ R_enc) @ We^T == a @ (R_enc @ We^T)   (holds for any p and with softmax)
    pos_we = pos @ params["We_w"].T                       # [E, 1]  (tiny)
    rw = pos_we[pos_ids]                                  # [M, 1]

    # linear projections (Pallas), weight transposed once wrapper-side
    Xw = pallas_linear(X, params["Wx_w"].T, params["Wx_b"])   # [N, rep]
    Dw = pallas_linear(D, params["Wd_w"].T, params["Wd_b"])   # [M, rep]

    if float(p_factor) == 1.0 and not use_sm:
        # activation is the identity -> reassociate: never build the [N, M] matrix
        w = minerva_dt_r(Dw, rw, compute_dtype=compute_dtype)     # [rep, 1]
        return pallas_linear(Xw, w, params["We_b"])               # [N, 1]

    return minerva_pool(Xw, Dw, rw, params["We_b"], p_factor, use_sm,
                        compute_dtype=compute_dtype)              # [N, 1]


# ----------------------------------------------------------------------------
# pure-JAX reference (mirrors the torch forward literally)
# ----------------------------------------------------------------------------
def minerva_reference(params, X, D, R, p_factor=1.0, use_sm=False):
    enc = params["encoding_ids"]
    pos = params["pos_encoding"]
    pos_ids = jnp.argmin(jnp.abs(R - enc[None, :]), axis=1)
    R_enc = pos[pos_ids]
    Xw = X @ params["Wx_w"].T + params["Wx_b"]
    Dw = D @ params["Wd_w"].T + params["Wd_b"]
    a = Xw @ Dw.T
    a = jnp.power(jnp.abs(a), jnp.float32(p_factor)) * jnp.sign(a)
    if use_sm:
        a = jax.nn.softmax(a, axis=-1)
    echo = a @ R_enc
    return echo @ params["We_w"].T + params["We_b"]


if __name__ == "__main__":
    input_dim, rep_dim, R_dim = 32, 32, 4
    N, M = 8, 16

    key = jax.random.PRNGKey(0)
    k1, k2, k3, k4 = jax.random.split(key, 4)
    X = jax.random.normal(k1, (N, input_dim), dtype=jnp.float32)
    D = jax.random.normal(k2, (M, input_dim), dtype=jnp.float32)
    R = jax.random.uniform(k3, (M, 1), dtype=jnp.float32)
    params = init_params(k4, input_dim, rep_dim, R_dim)

    # default p_factor = 1 -> fully reassociated fast path
    out1 = jax.block_until_ready(
        minerva_with_encoding_forward(params, X, D, R, p_factor=1.0))
    ref1 = minerva_reference(params, X, D, R, p_factor=1.0)
    assert out1.shape == (N, 1)
    assert jnp.allclose(out1, ref1, atol=1e-4, rtol=1e-4)

    # p_factor = 3 -> general tiled accumulator kernel (integer-power activation)
    out3 = jax.block_until_ready(
        minerva_with_encoding_forward(params, X, D, R, p_factor=3.0))
    ref3 = minerva_reference(params, X, D, R, p_factor=3.0)
    assert out3.shape == (N, 1)
    assert jnp.allclose(out3, ref3, atol=2e-3, rtol=2e-3)

    # p_factor = 2, use_sm = True -> online-softmax pooling kernel
    outs = jax.block_until_ready(
        minerva_with_encoding_forward(params, X, D, R, p_factor=2.0, use_sm=True))
    refs = minerva_reference(params, X, D, R, p_factor=2.0, use_sm=True)
    assert outs.shape == (N, 1)
    assert jnp.allclose(outs, refs, atol=1e-4, rtol=1e-4)

    print("KERNEL_OK")
</pallas_src>

<mosaic_0001>
module attributes {stable_mosaic.version = 11 : i64} {
  func.func @_linear_kernel(%arg0: i32, %arg1: memref<8x128xf32, #tpu.memory_space<vmem>>, %arg2: memref<128x128xf32, #tpu.memory_space<vmem>>, %arg3: memref<1x128xf32, #tpu.memory_space<vmem>>, %arg4: memref<8x128xf32, #tpu.memory_space<vmem>>) attributes {dimension_semantics = [#tpu.dimension_semantics<parallel>], iteration_bounds = array<i64: 1>, scalar_prefetch = 0 : i64, scratch_operands = 0 : i64, tpu.core_type = #tpu.core_type<tc>, window_params = [{transform_indices = @transform_0, window_bounds = array<i64: 8, 128>}, {pipeline_mode = #tpu.pipeline_mode<synchronous>, transform_indices = @transform_1, window_bounds = array<i64: 128, 128>}, {pipeline_mode = #tpu.pipeline_mode<synchronous>, transform_indices = @transform_2, window_bounds = array<i64: 1, 128>}, {transform_indices = @transform_3, window_bounds = array<i64: 8, 128>}]} {
    %c0 = arith.constant 0 : index
    %c0_0 = arith.constant 0 : index
    %0 = vector.load %arg1[%c0, %c0_0] : memref<8x128xf32, #tpu.memory_space<vmem>>, vector<8x128xf32>
    %c0_1 = arith.constant 0 : index
    %c0_2 = arith.constant 0 : index
    %1 = vector.load %arg2[%c0_1, %c0_2] : memref<128x128xf32, #tpu.memory_space<vmem>>, vector<128x128xf32>
    %cst = arith.constant dense<0.000000e+00> : vector<8x128xf32>
    %2 = tpu.matmul %0, %1, %cst {dimension_numbers = #tpu.dot_dimension_numbers<[1], [0], [0], [1], [0, 0, 1, 1], [], []>} : vector<8x128xf32>, vector<128x128xf32>, vector<8x128xf32> -> vector<8x128xf32>
    %c0_3 = arith.constant 0 : index
    %c0_4 = arith.constant 0 : index
    %3 = vector.load %arg3[%c0_3, %c0_4] : memref<1x128xf32, #tpu.memory_space<vmem>>, vector<1x128xf32>
    %4 = vector.broadcast %3 : vector<1x128xf32> to vector<8x128xf32>
    %5 = arith.addf %2, %4 : vector<8x128xf32>
    %c0_5 = arith.constant 0 : index
    %c0_6 = arith.constant 0 : index
    %6 = vector.load %arg4[%c0_5, %c0_6] : memref<8x128xf32, #tpu.memory_space<vmem>>, vector<8x128xf32>
    tpu.vector_store %arg4[%c0_5, %c0_6], %5 {strides = array<i32>} : memref<8x128xf32, #tpu.memory_space<vmem>>, vector<8x128xf32>,
    return
  }
  func.func @transform_0(%arg0: i32) -> (i32, i32) {
    %c0_i32 = arith.constant 0 : i32
    %c0_i32_0 = arith.constant 0 : i32
    return %arg0, %c0_i32 : i32, i32
  }
  func.func @transform_1(%arg0: i32) -> (i32, i32) {
    %c0_i32 = arith.constant 0 : i32
    %c0_i32_0 = arith.constant 0 : i32
    %c0_i32_1 = arith.constant 0 : i32
    return %c0_i32, %c0_i32_0 : i32, i32
  }
  func.func @transform_2(%arg0: i32) -> (i32, i32) {
    %c0_i32 = arith.constant 0 : i32
    %c0_i32_0 = arith.constant 0 : i32
    %c0_i32_1 = arith.constant 0 : i32
    return %c0_i32, %c0_i32_0 : i32, i32
  }
  func.func @transform_3(%arg0: i32) -> (i32, i32) {
    %c0_i32 = arith.constant 0 : i32
    %c0_i32_0 = arith.constant 0 : i32
    return %arg0, %c0_i32 : i32, i32
  }
}

</mosaic_0001>

<llo_original>
// kernel: tpu_custom_call.1
$region0: #{tpu_custom_call.1}
  #allocation0 [shape = 'u32[]', space=smem, size = 0x4, offset = 0x4, fixed_abs, tag = 'smem constant byte address 0x4 - core index']
  #allocation1 [shape = 'u32[144,128]{1,0:T(1,128)}', space=vmem, size = 0x12000, scoped, tag = 'internal scratch']
  %s0 = inlined_call_operand.hbm [shape: f32[8,128], index: 0, kind: input, shape index: {}]
  %s1 = inlined_call_operand.hbm [shape: f32[128,128], index: 1, kind: input, shape index: {}]
  %s2 = inlined_call_operand.vmem [shape: f32[1,128], index: 2, kind: input, shape index: {}]
  %s3 = inlined_call_operand.hbm [shape: f32[8,128], index: 3, kind: output, shape index: {}]
  %s4 = sld [smem:[#allocation0]]
  $region30: #{tpu_custom_call.1} parent=0
    _
  %s6 = ssub.s32 1, %s4
  %s7 = scalar_select 0, %s6, %s4
  $region1: #{tpu_custom_call.1} parent=0
    #allocation2 [shape = 'u8[4096]{0}', space=vmem, size = 0x1000, scoped, tag = 'input window, operand 0, single buffered']
    #allocation3 [shape = 's32[1]{0}', space=sflag, size = 0x4, scoped, tag = 'scoped memory for tpu_custom_call.1']
    #allocation4 [shape = 's32[1]{0}', space=sflag, size = 0x4, scoped, tag = 'scoped memory for tpu_custom_call.1']
    #allocation5 [shape = 'u8[65536]{0}', space=vmem, size = 0x10000, scoped, tag = 'input window, operand 1, single buffered']
    #allocation6 [shape = 's32[1]{0}', space=sflag, size = 0x4, scoped, tag = 'scoped memory for tpu_custom_call.1']
    #allocation7 [shape = 'u8[4096]{0}', space=vmem, size = 0x1000, scoped, tag = 'output window, operand 0, single buffered']
    %8 = vsyncpa [#allocation3], 0
    %9 = vsyncpa [#allocation6], 0
    %10 = vsyncpa [#allocation4], 0
    // Predicated region
    $region2: #{tpu_custom_call.1} parent=1 // pred_check
      _
    $region3: #{tpu_custom_call.1} parent=1 // pred_check_branch
      %12 = sbr.rel (0) target = $region5
    $region4: #{tpu_custom_call.1} parent=1 // pred_region
      %s14 = ssub.s32 128, 128
      %15 = vsyncadd [#allocation3], %s14
      %s17 = sshll.u32 [#allocation2], 4
      %s18 = int_to_ptr.vmem [resolvable:$true] %s17
      %20 = dma.hbm_to_vmem [thread:$0]  %s0, 128, %s18, [#allocation3]
    $region5: #{tpu_custom_call.1} parent=1 // pred_fallthru
      _
    // Predicated region
    $region6: #{tpu_custom_call.1} parent=1 // pred_check
      _
    $region7: #{tpu_custom_call.1} parent=1 // pred_check_branch
      %22 = sbr.rel (0) target = $region9
    $region8: #{tpu_custom_call.1} parent=1 // pred_region
      %s24 = ssub.s32 2048, 2048
      %25 = vsyncadd [#allocation6], %s24
      %s26 = sshll.u32 [#allocation5], 4
      %s27 = int_to_ptr.vmem [resolvable:$true] %s26
      %32 = dma.hbm_to_vmem [thread:$0]  %s1, 2048, %s27, [#allocation6], 128, 128, 8
    $region9: #{tpu_custom_call.1} parent=1 // pred_fallthru
      _
    // Predicated region
    $region10: #{tpu_custom_call.1} parent=1 // pred_check
      _
    $region11: #{tpu_custom_call.1} parent=1 // pred_check_branch
      %34 = sbr.rel (0) target = $region13
    $region12: #{tpu_custom_call.1} parent=1 // pred_region
      _
    $region13: #{tpu_custom_call.1} parent=1 // pred_fallthru
      _
    // Predicated region
    $region14: #{tpu_custom_call.1} parent=1 // pred_check
      _
    $region15: #{tpu_custom_call.1} parent=1 // pred_check_branch
      %36 = sbr.rel (0) target = $region17
    $region16: #{tpu_custom_call.1} parent=1 // pred_region
      %37 = dma.done [#allocation3], 128
    $region17: #{tpu_custom_call.1} parent=1 // pred_fallthru
      _
    // Predicated region
    $region18: #{tpu_custom_call.1} parent=1 // pred_check
      _
    $region19: #{tpu_custom_call.1} parent=1 // pred_check_branch
      %39 = sbr.rel (0) target = $region21
    $region20: #{tpu_custom_call.1} parent=1 // pred_region
      %40 = dma.done [#allocation6], 2048
    $region21: #{tpu_custom_call.1} parent=1 // pred_fallthru
      _
    %v41 = vld [vmem:[#allocation2] sm:$0xff]
    %v42 = vld [vmem:[#allocation5] sm:$0xff]
    %v43 = vld [vmem:[#allocation5 + $0x8] sm:$0xff]
    %v44 = vld [vmem:[#allocation5 + $0x10] sm:$0xff]
    %v45 = vld [vmem:[#allocation5 + $0x18] sm:$0xff]
    %v46 = vld [vmem:[#allocation5 + $0x20] sm:$0xff]
    %v47 = vld [vmem:[#allocation5 + $0x28] sm:$0xff]
    %v48 = vld [vmem:[#allocation5 + $0x30] sm:$0xff]
    %v49 = vld [vmem:[#allocation5 + $0x38] sm:$0xff]
    %v50 = vld [vmem:[#allocation5 + $0x40] sm:$0xff]
    %v51 = vld [vmem:[#allocation5 + $0x48] sm:$0xff]
    %v52 = vld [vmem:[#allocation5 + $0x50] sm:$0xff]
    %v53 = vld [vmem:[#allocation5 + $0x58] sm:$0xff]
    %v54 = vld [vmem:[#allocation5 + $0x60] sm:$0xff]
    %v55 = vld [vmem:[#allocation5 + $0x68] sm:$0xff]
    %v56 = vld [vmem:[#allocation5 + $0x70] sm:$0xff]
    %v57 = vld [vmem:[#allocation5 + $0x78] sm:$0xff]
    %v58 = vld [vmem:[%s2] sm:$0x1]
    %v60 = vlaneseq
    %v61 = vshrl.u32 %v60, 7
    %v62 = vsub.s32 0, %v61
    %v63 = vrot.slane %v58, %v62
    %65 = vmatprep.subr.mxu0 0.0
    %66 = vmatpush1.msra.mxu0 %v57
    %67 = vmatprep.subr.mxu0 0.0
    %68 = vmatpush1.msra.mxu0 %v56
    %69 = vmatprep.subr.mxu0 0.0
    %70 = vmatpush1.msra.mxu0 %v55
    %71 = vmatprep.subr.mxu0 0.0
    %72 = vmatpush1.msra.mxu0 %v54
    %73 = vmatprep.subr.mxu0 0.0
    %74 = vmatpush1.msra.mxu0 %v53
    %75 = vmatprep.subr.mxu0 0.0
    %76 = vmatpush1.msra.mxu0 %v52
    %77 = vmatprep.subr.mxu0 0.0
    %78 = vmatpush1.msra.mxu0 %v51
    %79 = vmatprep.subr.mxu0 0.0
    %80 = vmatpush1.msra.mxu0 %v50
    %81 = vmatprep.subr.mxu0 0.0
    %82 = vmatpush1.msra.mxu0 %v49
    %83 = vmatprep.subr.mxu0 0.0
    %84 = vmatpush1.msra.mxu0 %v48
    %85 = vmatprep.subr.mxu0 0.0
    %86 = vmatpush1.msra.mxu0 %v47
    %87 = vmatprep.subr.mxu0 0.0
    %88 = vmatpush1.msra.mxu0 %v46
    %89 = vmatprep.subr.mxu0 0.0
    %90 = vmatpush1.msra.mxu0 %v45
    %91 = vmatprep.subr.mxu0 0.0
    %92 = vmatpush1.msra.mxu0 %v44
    %93 = vmatprep.subr.mxu0 0.0
    %94 = vmatpush1.msra.mxu0 %v43
    %95 = vmatprep.subr.mxu0 0.0
    %96 = vmatpush1.msra.mxu0 %v42
    %97 = vmatprep.subr.mxu0 0.0
    %98 = vmatpush2.msra.mxu0 0.0
    %99 = vmatprep.subr.mxu0 0.0
    %100 = vmatpush2.msra.mxu0 0.0
    %101 = vmatprep.subr.mxu0 0.0
    %102 = vmatpush2.msra.mxu0 0.0
    %103 = vmatprep.subr.mxu0 0.0
    %104 = vmatpush2.msra.mxu0 0.0
    %105 = vmatprep.subr.mxu0 0.0
    %106 = vmatpush2.msra.mxu0 0.0
    %107 = vmatprep.subr.mxu0 0.0
    %108 = vmatpush2.msra.mxu0 0.0
    %109 = vmatprep.subr.mxu0 0.0
    %110 = vmatpush2.msra.mxu0 0.0
    %111 = vmatprep.subr.mxu0 0.0
    %112 = vmatpush2.msra.mxu0 0.0
    %113 = vmatprep.subr.mxu0 0.0
    %114 = vmatpush2.msra.mxu0 0.0
    %115 = vmatprep.subr.mxu0 0.0
    %116 = vmatpush2.msra.mxu0 0.0
    %117 = vmatprep.subr.mxu0 0.0
    %118 = vmatpush2.msra.mxu0 0.0
    %119 = vmatprep.subr.mxu0 0.0
    %120 = vmatpush2.msra.mxu0 0.0
    %121 = vmatprep.subr.mxu0 0.0
    %122 = vmatpush2.msra.mxu0 0.0
    %123 = vmatprep.subr.mxu0 0.0
    %124 = vmatpush2.msra.mxu0 0.0
    %125 = vmatprep.subr.mxu0 0.0
    %126 = vmatpush2.msra.mxu0 0.0
    %127 = vmatprep.subr.mxu0 0.0
    %128 = vmatpush2.msra.mxu0 0.0
    %129 = vmatprep.mubr.f32.mxu0 0.0
    %130 = vmatmul.mubr.f32.gmra.mxu0 %v41
    %v131 = vpop.f32.mrf.mxu0
    %v132 = vadd.f32 %v63, %v131
    %v133 = vpop.f32.mrf.mxu0
    %134 = vdwg.mxu0
    %135 = vst [vmem:[#allocation7] sm:$0xff] %v132
    // Predicated region
    $region22: #{tpu_custom_call.1} parent=1 // pred_check
      _
    $region23: #{tpu_custom_call.1} parent=1 // pred_check_branch
      %137 = sbr.rel (0) target = $region25
    $region24: #{tpu_custom_call.1} parent=1 // pred_region
      %s139 = ssub.s32 128, 128
      %140 = vsyncadd [#allocation4], %s139
      %s142 = sshll.u32 [#allocation7], 4
      %s143 = int_to_ptr.vmem [resolvable:$true] %s142
      %145 = dma.vmem_to_hbm [thread:$0]  %s143, 128, %s3, [#allocation4]
    $region25: #{tpu_custom_call.1} parent=1 // pred_fallthru
      _
    // Predicated region
    $region26: #{tpu_custom_call.1} parent=1 // pred_check
      _
    $region27: #{tpu_custom_call.1} parent=1 // pred_check_branch
      %147 = sbr.rel (0) target = $region29
    $region28: #{tpu_custom_call.1} parent=1 // pred_region
      %148 = dma.done [#allocation4], 128
    $region29: #{tpu_custom_call.1} parent=1 // pred_fallthru
      _
    %149 = vsyncpa [#allocation3], 1
    %150 = vsyncpa [#allocation6], 1
    %151 = vsyncpa [#allocation4], 1

</llo_original>
